<compile_context>
chip_gen: v7x
topology: tpu7x:2x2x1
jax: 0.10.0
libtpu: 0.0.40
codegen_flags: <defaults>
</compile_context>

<pallas_src>
import jax
import jax.numpy as jnp
from jax.experimental import pallas as pl
from jax.experimental.pallas import tpu as pltpu

_GELU_C = 0.7978845608028654  # sqrt(2 / pi)


def _gelu_tanh(x):
    """PyTorch nn.GELU(approximate='tanh')."""
    return 0.5 * x * (1.0 + jnp.tanh(_GELU_C * (x + 0.044715 * x * x * x)))


def _round_up(x, m):
    return ((x + m - 1) // m) * m


# ----------------------------- Pallas kernel -----------------------------

def _mlp_kernel(x_ref, w1_ref, b1_ref, w2_ref, b2_ref, o_ref, acc_ref):
    """One (token tile, hidden tile) step of fc1 -> GELU -> fc2.

    Grid = (token tiles [parallel], hidden tiles [arbitrary, reduction]).
    acc_ref is an (tm, O) f32 accumulator resident across the hidden axis.
    """
    k = pl.program_id(1)

    @pl.when(k == 0)
    def _init():
        acc_ref[...] = jnp.zeros_like(acc_ref)

    # fc1 slice: (tm, D) @ (D, th) on the MXU, bf16 operands, f32 accumulate.
    h = jnp.dot(x_ref[...], w1_ref[...], preferred_element_type=jnp.float32)
    h = h + b1_ref[...].astype(jnp.float32)          # (tm, th) f32
    h = _gelu_tanh(h)                                 # f32 on VPU/EUP

    # fc2 partial product for this hidden slice, accumulated in f32.
    acc_ref[...] += jnp.dot(h.astype(w2_ref.dtype), w2_ref[...],
                            preferred_element_type=jnp.float32)

    @pl.when(k == pl.num_programs(1) - 1)
    def _finalize():
        o_ref[...] = (acc_ref[...] + b2_ref[...].astype(jnp.float32)).astype(o_ref.dtype)


# ----------------------------- wrapper -----------------------------

def mlp_forward(x, w1, b1, w2, b2, *, block_m=512, block_h=512):
    """x: (..., D); w1: (D, H); b1: (H,); w2: (H, O); b2: (O,)."""
    *lead, D = x.shape
    H = w1.shape[1]
    O = w2.shape[1]
    out_dtype = x.dtype

    x2 = x.reshape(-1, D)
    M = x2.shape[0]

    # ---- token (M) tiling: pad up instead of collapsing to one block ----
    m8 = _round_up(max(M, 8), 8)
    tm = min(block_m, m8)
    tm = _round_up(tm, 8)
    # Keep >= 2 token tiles when possible so v7x can shard across its 2 TCs.
    if (m8 // tm) < 2 and m8 >= 16:
        tm = _round_up(pl.cdiv(m8, 2), 8)
    M_pad = _round_up(m8, tm)
    grid_m = M_pad // tm

    # ---- hidden (H) tiling: reduction axis, last in the grid ----
    th = min(block_h, H)
    if H % th != 0:
        th = H  # fall back to full hidden residency for awkward sizes
    n_h = H // th

    # ---- operands: bf16 MXU inputs, f32 biases ----
    if M_pad != M:
        x2 = jnp.pad(x2, ((0, M_pad - M), (0, 0)))
    x_bf16 = x2.astype(jnp.bfloat16)
    w1_bf16 = w1.astype(jnp.bfloat16)
    w2_bf16 = w2.astype(jnp.bfloat16)
    b1_f32 = b1.reshape(1, H).astype(jnp.float32)
    b2_f32 = b2.reshape(1, O).astype(jnp.float32)

    # ---- BlockSpecs (single-buffer grid-invariant operands) ----
    def _spec(shape, index_map, single_buffer):
        if single_buffer:
            return pl.BlockSpec(shape, index_map, pipeline_mode=pl.Buffered(1))
        return pl.BlockSpec(shape, index_map)

    weights_invariant = (n_h == 1)
    in_specs = [
        pl.BlockSpec((tm, D), lambda i, k: (i, 0)),               # activations
        _spec((D, th), lambda i, k: (0, k), weights_invariant),   # fc1 weight
        _spec((1, th), lambda i, k: (0, k), weights_invariant),   # fc1 bias
        _spec((th, O), lambda i, k: (k, 0), weights_invariant),   # fc2 weight
        _spec((1, O), lambda i, k: (0, 0), True),                 # fc2 bias (invariant)
    ]
    out_spec = pl.BlockSpec((tm, O), lambda i, k: (i, 0))

    # ---- VMEM budget (bf16 operands, bias/acc in f32, sublane padding) ----
    itemsize_out = jnp.dtype(out_dtype).itemsize
    w_bufs = 1 if weights_invariant else 2
    vmem_bytes = (
        2 * tm * D * 2                                     # x tiles, double-buffered bf16
        + w_bufs * (D * th * 2 + th * O * 2 + 8 * th * 4)  # w1 + w2 + b1 tiles
        + 8 * O * 4                                        # b2 (single-buffered)
        + 2 * tm * O * itemsize_out                        # output tiles
        + tm * O * 4                                       # f32 accumulator scratch
        + 2 * tm * th * 4                                  # headroom: (tm, th) f32 intermediate
    )
    vmem_limit = int(min(max(vmem_bytes * 1.5 + (2 << 20), 32 << 20), 64 << 20))

    cost = pl.CostEstimate(
        flops=2 * M_pad * (D * H + H * O),
        transcendentals=M_pad * H,
        bytes_accessed=int(M_pad * D * 2 + (D * H + H * O) * 2 + (H + O) * 4
                           + M_pad * O * itemsize_out),
    )

    out = pl.pallas_call(
        _mlp_kernel,
        out_shape=jax.ShapeDtypeStruct((M_pad, O), out_dtype),
        grid=(grid_m, n_h),
        in_specs=in_specs,
        out_specs=out_spec,
        scratch_shapes=[pltpu.VMEM((tm, O), jnp.float32)],
        compiler_params=pltpu.CompilerParams(
            dimension_semantics=("parallel", "arbitrary"),
            vmem_limit_bytes=vmem_limit,
        ),
        cost_estimate=cost,
    )(x_bf16, w1_bf16, b1_f32, w2_bf16, b2_f32)

    if M_pad != M:
        out = out[:M]
    return out.reshape(*lead, O)


# ----------------------------- pure-JAX reference -----------------------------

def ref_forward(x, w1, b1, w2, b2):
    h = _gelu_tanh(x @ w1 + b1)
    return h @ w2 + b2


# ----------------------------- main -----------------------------

if __name__ == "__main__":
    B, T = 2, 128            # batch, sequence  -> M = 256 tokens
    D = 128                  # in_features (== out_features by default)
    Hdim = 512               # hidden_features (4x)
    O = D

    key = jax.random.PRNGKey(0)
    kx, k1, k2, k3, k4 = jax.random.split(key, 5)
    x = jax.random.normal(kx, (B, T, D), jnp.float32)
    # JAX-layout weights: (in, out); equivalent to PyTorch's (out, in) transposed.
    w1 = 0.05 * jax.random.normal(k1, (D, Hdim), jnp.float32)
    b1 = 0.05 * jax.random.normal(k2, (Hdim,), jnp.float32)
    w2 = 0.05 * jax.random.normal(k3, (Hdim, O), jnp.float32)
    b2 = 0.05 * jax.random.normal(k4, (O,), jnp.float32)

    # block_m=128 -> 2 token tiles; block_h=256 -> 2 hidden tiles, exercising
    # the accumulator / pl.when init-finalize path on hardware.
    out = mlp_forward(x, w1, b1, w2, b2, block_m=128, block_h=256)
    out = jax.block_until_ready(out)

    ref = ref_forward(x, w1, b1, w2, b2)
    assert out.shape == (B, T, O)
    # bf16 MXU operands with f32 accumulation: compare against the f32
    # reference with a correspondingly relaxed tolerance.
    err = float(jnp.max(jnp.abs(out.astype(jnp.float32) - ref)))
    assert jnp.allclose(out.astype(jnp.float32), ref, atol=3e-2, rtol=3e-2), err

    print("KERNEL_OK")
</pallas_src>

<mosaic_0001>
module attributes {stable_mosaic.version = 11 : i64} {
  func.func @_mlp_kernel(%arg0: i32, %arg1: i32, %arg2: memref<128x128xbf16, #tpu.memory_space<vmem>>, %arg3: memref<128x256xbf16, #tpu.memory_space<vmem>>, %arg4: memref<1x256xf32, #tpu.memory_space<vmem>>, %arg5: memref<256x128xbf16, #tpu.memory_space<vmem>>, %arg6: memref<1x128xf32, #tpu.memory_space<vmem>>, %arg7: memref<128x128xf32, #tpu.memory_space<vmem>>, %arg8: memref<128x128xf32, #tpu.memory_space<vmem>>) attributes {dimension_semantics = [#tpu.dimension_semantics<parallel>, #tpu.dimension_semantics<arbitrary>], iteration_bounds = array<i64: 2, 2>, scalar_prefetch = 0 : i64, scratch_operands = 1 : i64, tpu.core_type = #tpu.core_type<tc>, window_params = [{transform_indices = @transform_0, window_bounds = array<i64: 128, 128>}, {transform_indices = @transform_1, window_bounds = array<i64: 128, 256>}, {transform_indices = @transform_2, window_bounds = array<i64: 1, 256>}, {transform_indices = @transform_3, window_bounds = array<i64: 256, 128>}, {pipeline_mode = #tpu.pipeline_mode<synchronous>, transform_indices = @transform_4, window_bounds = array<i64: 1, 128>}, {transform_indices = @transform_5, window_bounds = array<i64: 128, 128>}]} {
    %c0_i32 = arith.constant 0 : i32
    %0 = arith.cmpi eq, %arg1, %c0_i32 : i32
    %1 = arith.extui %0 : i1 to i32
    %c0_i32_0 = arith.constant 0 : i32
    %2 = arith.cmpi ne, %1, %c0_i32_0 : i32
    scf.if %2 {
      %cst_18 = arith.constant 0.000000e+00 : f32
      %31 = vector.broadcast %cst_18 : f32 to vector<128x128xf32>
      %c0_19 = arith.constant 0 : index
      %c0_20 = arith.constant 0 : index
      %32 = vector.load %arg8[%c0_19, %c0_20] : memref<128x128xf32, #tpu.memory_space<vmem>>, vector<128x128xf32>
      tpu.vector_store %arg8[%c0_19, %c0_20], %31 {strides = array<i32>} : memref<128x128xf32, #tpu.memory_space<vmem>>, vector<128x128xf32>,
    } else {
    }
    %c0 = arith.constant 0 : index
    %c0_1 = arith.constant 0 : index
    %3 = vector.load %arg2[%c0, %c0_1] : memref<128x128xbf16, #tpu.memory_space<vmem>>, vector<128x128xbf16>
    %c0_2 = arith.constant 0 : index
    %c0_3 = arith.constant 0 : index
    %4 = vector.load %arg3[%c0_2, %c0_3] : memref<128x256xbf16, #tpu.memory_space<vmem>>, vector<128x256xbf16>
    %cst = arith.constant dense<0.000000e+00> : vector<128x256xf32>
    %5 = tpu.matmul %3, %4, %cst {dimension_numbers = #tpu.dot_dimension_numbers<[1], [0], [0], [1], [0, 0, 1, 1], [], []>} : vector<128x128xbf16>, vector<128x256xbf16>, vector<128x256xf32> -> vector<128x256xf32>
    %c0_4 = arith.constant 0 : index
    %c0_5 = arith.constant 0 : index
    %6 = vector.load %arg4[%c0_4, %c0_5] : memref<1x256xf32, #tpu.memory_space<vmem>>, vector<1x256xf32>
    %7 = vector.broadcast %6 : vector<1x256xf32> to vector<128x256xf32>
    %8 = arith.addf %5, %7 : vector<128x256xf32>
    %cst_6 = arith.constant 5.000000e-01 : f32
    %9 = vector.broadcast %cst_6 : f32 to vector<128x256xf32>
    %10 = arith.mulf %9, %8 : vector<128x256xf32>
    %cst_7 = arith.constant 4.471500e-02 : f32
    %11 = vector.broadcast %cst_7 : f32 to vector<128x256xf32>
    %12 = arith.mulf %11, %8 : vector<128x256xf32>
    %13 = arith.mulf %12, %8 : vector<128x256xf32>
    %14 = arith.mulf %13, %8 : vector<128x256xf32>
    %15 = arith.addf %8, %14 : vector<128x256xf32>
    %cst_8 = arith.constant 0.797884583 : f32
    %16 = vector.broadcast %cst_8 : f32 to vector<128x256xf32>
    %17 = arith.mulf %16, %15 : vector<128x256xf32>
    %18 = math.tanh %17 : vector<128x256xf32>
    %cst_9 = arith.constant 1.000000e+00 : f32
    %19 = vector.broadcast %cst_9 : f32 to vector<128x256xf32>
    %20 = arith.addf %19, %18 : vector<128x256xf32>
    %21 = arith.mulf %10, %20 : vector<128x256xf32>
    %c0_10 = arith.constant 0 : index
    %c0_11 = arith.constant 0 : index
    %22 = vector.load %arg8[%c0_10, %c0_11] : memref<128x128xf32, #tpu.memory_space<vmem>>, vector<128x128xf32>
    %23 = arith.truncf %21 : vector<128x256xf32> to vector<128x256xbf16>
    %c0_12 = arith.constant 0 : index
    %c0_13 = arith.constant 0 : index
    %24 = vector.load %arg5[%c0_12, %c0_13] : memref<256x128xbf16, #tpu.memory_space<vmem>>, vector<256x128xbf16>
    %cst_14 = arith.constant dense<0.000000e+00> : vector<128x128xf32>
    %25 = tpu.matmul %23, %24, %cst_14 {dimension_numbers = #tpu.dot_dimension_numbers<[1], [0], [0], [1], [0, 0, 1, 1], [], []>} : vector<128x256xbf16>, vector<256x128xbf16>, vector<128x128xf32> -> vector<128x128xf32>
    %26 = arith.addf %22, %25 : vector<128x128xf32>
    %c0_15 = arith.constant 0 : index
    %c0_16 = arith.constant 0 : index
    %27 = vector.load %arg8[%c0_15, %c0_16] : memref<128x128xf32, #tpu.memory_space<vmem>>, vector<128x128xf32>
    tpu.vector_store %arg8[%c0_15, %c0_16], %26 {strides = array<i32>} : memref<128x128xf32, #tpu.memory_space<vmem>>, vector<128x128xf32>,
    %c1_i32 = arith.constant 1 : i32
    %28 = arith.cmpi eq, %arg1, %c1_i32 : i32
    %29 = arith.extui %28 : i1 to i32
    %c0_i32_17 = arith.constant 0 : i32
    %30 = arith.cmpi ne, %29, %c0_i32_17 : i32
    scf.if %30 {
      %c0_18 = arith.constant 0 : index
      %c0_19 = arith.constant 0 : index
      %31 = vector.load %arg8[%c0_18, %c0_19] : memref<128x128xf32, #tpu.memory_space<vmem>>, vector<128x128xf32>
      %c0_20 = arith.constant 0 : index
      %c0_21 = arith.constant 0 : index
      %32 = vector.load %arg6[%c0_20, %c0_21] : memref<1x128xf32, #tpu.memory_space<vmem>>, vector<1x128xf32>
      %33 = vector.broadcast %32 : vector<1x128xf32> to vector<128x128xf32>
      %34 = arith.addf %31, %33 : vector<128x128xf32>
      %c0_22 = arith.constant 0 : index
      %c0_23 = arith.constant 0 : index
      %35 = vector.load %arg7[%c0_22, %c0_23] : memref<128x128xf32, #tpu.memory_space<vmem>>, vector<128x128xf32>
      tpu.vector_store %arg7[%c0_22, %c0_23], %34 {strides = array<i32>} : memref<128x128xf32, #tpu.memory_space<vmem>>, vector<128x128xf32>,
    } else {
    }
    return
  }
  func.func @transform_0(%arg0: i32, %arg1: i32) -> (i32, i32) {
    %c0_i32 = arith.constant 0 : i32
    %c0_i32_0 = arith.constant 0 : i32
    return %arg0, %c0_i32 : i32, i32
  }
  func.func @transform_1(%arg0: i32, %arg1: i32) -> (i32, i32) {
    %c0_i32 = arith.constant 0 : i32
    %c0_i32_0 = arith.constant 0 : i32
    return %c0_i32, %arg1 : i32, i32
  }
  func.func @transform_2(%arg0: i32, %arg1: i32) -> (i32, i32) {
    %c0_i32 = arith.constant 0 : i32
    %c0_i32_0 = arith.constant 0 : i32
    return %c0_i32, %arg1 : i32, i32
  }
  func.func @transform_3(%arg0: i32, %arg1: i32) -> (i32, i32) {
    %c0_i32 = arith.constant 0 : i32
    %c0_i32_0 = arith.constant 0 : i32
    return %arg1, %c0_i32 : i32, i32
  }
  func.func @transform_4(%arg0: i32, %arg1: i32) -> (i32, i32) {
    %c0_i32 = arith.constant 0 : i32
    %c0_i32_0 = arith.constant 0 : i32
    %c0_i32_1 = arith.constant 0 : i32
    return %c0_i32, %c0_i32_0 : i32, i32
  }
  func.func @transform_5(%arg0: i32, %arg1: i32) -> (i32, i32) {
    %c0_i32 = arith.constant 0 : i32
    %c0_i32_0 = arith.constant 0 : i32
    return %arg0, %c0_i32 : i32, i32
  }
}

</mosaic_0001>

<llo_original>
// kernel: tpu_custom_call.1
$region0: #{tpu_custom_call.1}
  #allocation0 [shape = 'u32[]', space=smem, size = 0x4, offset = 0x4, fixed_abs, tag = 'smem constant byte address 0x4 - core index']
  #allocation1 [shape = 'u32[144,128]{1,0:T(1,128)}', space=vmem, size = 0x12000, scoped, tag = 'internal scratch']
  #allocation2 [shape = 'f32[128,128]{1,0:T(8,128)}', space=vmem, size = 0x10000, scoped, tag = 'scratch operand']
  %s0 = inlined_call_operand.hbm [shape: bf16[256,128], index: 0, kind: input, shape index: {}]
  %s1 = inlined_call_operand.hbm [shape: bf16[128,512], index: 1, kind: input, shape index: {}]
  %s2 = inlined_call_operand.vmem [shape: f32[1,512], index: 2, kind: input, shape index: {}]
  %s3 = inlined_call_operand.hbm [shape: bf16[512,128], index: 3, kind: input, shape index: {}]
  %s4 = inlined_call_operand.vmem [shape: f32[1,128], index: 4, kind: input, shape index: {}]
  %s5 = inlined_call_operand.hbm [shape: f32[256,128], index: 5, kind: output, shape index: {}]
  %s6 = sld [smem:[#allocation0]]
  $region73: #{tpu_custom_call.1} parent=0
    _
  %s8 = ssub.s32 1, %s6
  %s9 = scalar_select 0, %s8, %s6
  $region1: #{tpu_custom_call.1} parent=0
    #allocation3 [shape = 'u8[65536]{0}', space=vmem, size = 0x10000, scoped, tag = 'input window, operand 0']
    #allocation4 [shape = 's32[2]{0}', space=sflag, size = 0x8, scoped, tag = 'scoped memory for tpu_custom_call.1']
    #allocation5 [shape = 's32[2]{0}', space=sflag, size = 0x8, scoped, tag = 'scoped memory for tpu_custom_call.1']
    #allocation6 [shape = 'u8[131072]{0}', space=vmem, size = 0x20000, scoped, tag = 'input window, operand 1']
    #allocation7 [shape = 's32[2]{0}', space=sflag, size = 0x8, scoped, tag = 'scoped memory for tpu_custom_call.1']
    #allocation8 [shape = 'u8[131072]{0}', space=vmem, size = 0x20000, scoped, tag = 'input window, operand 3']
    #allocation9 [shape = 'u8[131072]{0}', space=vmem, size = 0x20000, scoped, tag = 'output window, operand 0']
    %10 = vsyncpa [#allocation4], 0
    %s11 = scalar_lea.sflag [#allocation4], 1
    %12 = vsyncpa %s11, 0
    %13 = vsyncpa [#allocation7], 0
    %s14 = scalar_lea.sflag [#allocation7], 1
    %15 = vsyncpa %s14, 0
    %16 = vsyncpa [#allocation5], 0
    %s17 = scalar_lea.sflag [#allocation5], 1
    %18 = vsyncpa %s17, 0
    loop: start=0, step=1, limit=6
    $region2: #{tpu_custom_call.1} parent=1 // loop_pre_header
      _
    $region3: #{tpu_custom_call.1} parent=1 // loop_header
      %s20 = sphi 0, %s24
      %p21 = scmp.ge.s32.totalorder %s20, 6
      %s27 = sphi 0, %s39
      %s28 = sphi 0, %s35
      %s29 = sphi 0, %s27
      %s30 = sphi 0, %s28
      %s31 = sphi 0, %s29
      %s32 = sphi 0, %s30
      %s42 = sphi 0, %s44
      %s45 = sphi 0, %s42
      %s46 = sphi 0, %s45
      %s62 = sphi 0, %s46
      %s68 = sphi 0, %s70
      %s71 = sphi 0, %s68
      %s72 = sphi 0, %s71
      %s88 = sphi 0, %s72
      %s94 = sphi 0, %s96
      %s97 = sphi 0, %s94
      %s98 = sphi 0, %s97
      %s114 = sphi 0, %s98
      %s120 = sphi 0, %s122
      %s123 = sphi 0, %s120
      %s124 = sphi 0, %s123
      %s140 = sphi 0, %s124
      %s144 = sphi 0, %s144
      %s146 = sphi 0, %s144
      %s147 = sphi 0, %s146
      %s161 = sphi 0, %s147
      %s167 = sphi 0, %s169
      %s170 = sphi 0, %s167
      %s171 = sphi 0, %s170
      %s187 = sphi 0, %s171
    $region4: #{tpu_custom_call.1} parent=1 // loop_header_branch
      %23 = sbr.rel (%p21) target = $region8
    $region5: #{tpu_custom_call.1} parent=1 // loop_body
      %s25 = ssub.s32 %s20, 1
      %s26 = ssub.s32 %s20, 2
      %s33 = sadd.s32 1, %s28
      %p34 = scmp.ge.s32.totalorder %s33, 2
      %s35 = scalar_select %p34, 0, %s33
      %s36 = sadd.s32 1, %s27
      %s37 = scalar_select %p34, %s36, %s27
      %p38 = scmp.ge.s32.totalorder %s37, 2
      %s39 = scalar_select %p38, 0, %s37
      %s40 = ssub.s32 %s27, %s39
      %p41 = scmp.eq.s32.totalorder %s40, 0
      %s43 = sadd.s32 %s42, 1
      %s44 = scalar_select %p41, %s42, %s43
      %p47 = pneg %p41
      %p48 = scmp.eq.s32.totalorder %s20, 3
      %p49 = por %p47, %p48
      %p50 = scmp.ne.s32.totalorder %s42, %s45
      %p51 = scmp.eq.s32.totalorder %s20, 0
      %p52 = por %p50, %p51
      %p53 = scmp.ne.s32.totalorder %s42, %s45
      %p54 = scmp.eq.s32.totalorder %s25, 3
      %p55 = por %p53, %p54
      %p56 = scmp.ne.s32.totalorder %s45, %s46
      %p57 = scmp.eq.s32.totalorder %s25, 0
      %p58 = por %p56, %p57
      %p59 = scmp.ne.s32.totalorder %s45, %s46
      %p60 = scmp.eq.s32.totalorder %s26, 3
      %p61 = por %p59, %p60
      %p63 = scmp.ne.s32.totalorder %s46, %s62
      %p64 = scmp.eq.s32.totalorder %s26, 0
      %p65 = por %p63, %p64
      %s66 = ssub.s32 %s28, %s35
      %p67 = scmp.eq.s32.totalorder %s66, 0
      %s69 = sadd.s32 %s68, 1
      %s70 = scalar_select %p67, %s68, %s69
      %p73 = pneg %p67
      %p74 = scmp.eq.s32.totalorder %s20, 3
      %p75 = por %p73, %p74
      %p76 = scmp.ne.s32.totalorder %s68, %s71
      %p77 = scmp.eq.s32.totalorder %s20, 0
      %p78 = por %p76, %p77
      %p79 = scmp.ne.s32.totalorder %s68, %s71
      %p80 = scmp.eq.s32.totalorder %s25, 3
      %p81 = por %p79, %p80
      %p82 = scmp.ne.s32.totalorder %s71, %s72
      %p83 = scmp.eq.s32.totalorder %s25, 0
      %p84 = por %p82, %p83
      %p85 = scmp.ne.s32.totalorder %s71, %s72
      %p86 = scmp.eq.s32.totalorder %s26, 3
      %p87 = por %p85, %p86
      %p89 = scmp.ne.s32.totalorder %s72, %s88
      %p90 = scmp.eq.s32.totalorder %s26, 0
      %p91 = por %p89, %p90
      %s92 = ssub.s32 %s28, %s35
      %p93 = scmp.eq.s32.totalorder %s92, 0
      %s95 = sadd.s32 %s94, 1
      %s96 = scalar_select %p93, %s94, %s95
      %p99 = pneg %p93
      %p100 = scmp.eq.s32.totalorder %s20, 3
      %p101 = por %p99, %p100
      %p102 = scmp.ne.s32.totalorder %s94, %s97
      %p103 = scmp.eq.s32.totalorder %s20, 0
      %p104 = por %p102, %p103
      %p105 = scmp.ne.s32.totalorder %s94, %s97
      %p106 = scmp.eq.s32.totalorder %s25, 3
      %p107 = por %p105, %p106
      %p108 = scmp.ne.s32.totalorder %s97, %s98
      %p109 = scmp.eq.s32.totalorder %s25, 0
      %p110 = por %p108, %p109
      %p111 = scmp.ne.s32.totalorder %s97, %s98
      %p112 = scmp.eq.s32.totalorder %s26, 3
      %p113 = por %p111, %p112
      %p115 = scmp.ne.s32.totalorder %s98, %s114
      %p116 = scmp.eq.s32.totalorder %s26, 0
      %p117 = por %p115, %p116
      %s118 = ssub.s32 %s28, %s35
      %p119 = scmp.eq.s32.totalorder %s118, 0
      %s121 = sadd.s32 %s120, 1
      %s122 = scalar_select %p119, %s120, %s121
      %p125 = pneg %p119
      %p126 = scmp.eq.s32.totalorder %s20, 3
      %p127 = por %p125, %p126
      %p128 = scmp.ne.s32.totalorder %s120, %s123
      %p129 = scmp.eq.s32.totalorder %s20, 0
      %p130 = por %p128, %p129
      %p131 = scmp.ne.s32.totalorder %s120, %s123
      %p132 = scmp.eq.s32.totalorder %s25, 3
      %p133 = por %p131, %p132
      %p134 = scmp.ne.s32.totalorder %s123, %s124
      %p135 = scmp.eq.s32.totalorder %s25, 0
      %p136 = por %p134, %p135
      %p137 = scmp.ne.s32.totalorder %s123, %s124
      %p138 = scmp.eq.s32.totalorder %s26, 3
      %p139 = por %p137, %p138
      %p141 = scmp.ne.s32.totalorder %s124, %s140
      %p142 = scmp.eq.s32.totalorder %s26, 0
      %p143 = por %p141, %p142
      %s145 = sadd.s32 %s144, 1
      %p148 = scmp.eq.s32.totalorder %s20, 3
      %p149 = scmp.ne.s32.totalorder %s144, %s146
      %p150 = scmp.eq.s32.totalorder %s20, 0
      %p151 = por %p149, %p150
      %p152 = scmp.ne.s32.totalorder %s144, %s146
      %p153 = scmp.eq.s32.totalorder %s25, 3
      %p154 = por %p152, %p153
      %p155 = scmp.ne.s32.totalorder %s146, %s147
      %p156 = scmp.eq.s32.totalorder %s25, 0
      %p157 = por %p155, %p156
      %p158 = scmp.ne.s32.totalorder %s146, %s147
      %p159 = scmp.eq.s32.totalorder %s26, 3
      %p160 = por %p158, %p159
      %p162 = scmp.ne.s32.totalorder %s147, %s161
      %p163 = scmp.eq.s32.totalorder %s26, 0
      %p164 = por %p162, %p163
      %s165 = ssub.s32 %s27, %s39
      %p166 = scmp.eq.s32.totalorder %s165, 0
      %s168 = sadd.s32 %s167, 1
      %s169 = scalar_select %p166, %s167, %s168
      %p172 = pneg %p166
      %p173 = scmp.eq.s32.totalorder %s20, 3
      %p174 = por %p172, %p173
      %p175 = scmp.ne.s32.totalorder %s167, %s170
      %p176 = scmp.eq.s32.totalorder %s20, 0
      %p177 = por %p175, %p176
      %p178 = scmp.ne.s32.totalorder %s167, %s170
      %p179 = scmp.eq.s32.totalorder %s25, 3
      %p180 = por %p178, %p179
      %p181 = scmp.ne.s32.totalorder %s170, %s171
      %p182 = scmp.eq.s32.totalorder %s25, 0
      %p183 = por %p181, %p182
      %p184 = scmp.ne.s32.totalorder %s170, %s171
      %p185 = scmp.eq.s32.totalorder %s26, 3
      %p186 = por %p184, %p185
      %p188 = scmp.ne.s32.totalorder %s171, %s187
      %p189 = scmp.eq.s32.totalorder %s26, 0
      %p190 = por %p188, %p189
      %p191 = scmp.le.s32.totalorder 1, %s20
      %p192 = scmp.lt.s32.totalorder %s20, 5
      %p193 = pnand %p191, %p192
      %p194 = pneg %p193
      // Predicated region
      $region9: #{tpu_custom_call.1} parent=5 // pred_check
        _
      $region10: #{tpu_custom_call.1} parent=5 // pred_check_branch
        %196 = sbr.rel (%p193) target = $region12
      $region11: #{tpu_custom_call.1} parent=5 // pred_region
        %s197 = ssub.s32 %s20, 1
        // Predicated region
        $region13: #{tpu_custom_call.1} parent=11 // pred_check
          %p198 = pneg %p157
        $region14: #{tpu_custom_call.1} parent=11 // pred_check_branch
          %200 = sbr.rel (%p198) target = $region16
        $region15: #{tpu_custom_call.1} parent=11 // pred_region
          _
        $region16: #{tpu_custom_call.1} parent=11 // pred_fallthru
          _
      $region12: #{tpu_custom_call.1} parent=5 // pred_fallthru
        _
      %p201 = scmp.lt.s32.totalorder %s20, 4
      // Predicated region
      $region17: #{tpu_custom_call.1} parent=5 // pred_check
        %p202 = pneg %p201
      $region18: #{tpu_custom_call.1} parent=5 // pred_check_branch
        %204 = sbr.rel (%p202) target = $region20
      $region19: #{tpu_custom_call.1} parent=5 // pred_region
        // Predicated region
        $region21: #{tpu_custom_call.1} parent=19 // pred_check
          %p205 = pneg %p52
        $region22: #{tpu_custom_call.1} parent=19 // pred_check_branch
          %207 = sbr.rel (%p205) target = $region24
        $region23: #{tpu_custom_call.1} parent=19 // pred_region
          %s208 = sand.u32 %s42, 1
          %s209 = scalar_lea.sflag [#allocation4], %s208
          %s210 = sand.u32 %s42, 1
          %s211 = smul.addr %s210, 64
          %s212 = scalar_lea.vmem [#allocation3], %s211
          %s213 = smul.u32 16, %s27
          %s215 = ssub.s32 1024, 1024
          %216 = vsyncadd %s209, %s215
          %s217 = smul.addr %s213, 64
          %s218 = scalar_lea.hbm %s0, %s217
          %s219 = sshll.u32 %s212, 4
          %s220 = int_to_ptr.vmem [resolvable:$true] %s219
          %225 = dma.hbm_to_vmem [thread:$0]  %s218, 1024, %s220, %s209, 64, 64, 4
        $region24: #{tpu_custom_call.1} parent=19 // pred_fallthru
          _
        // Predicated region
        $region25: #{tpu_custom_call.1} parent=19 // pred_check
          %p226 = pneg %p78
        $region26: #{tpu_custom_call.1} parent=19 // pred_check_branch
          %228 = sbr.rel (%p226) target = $region28
        $region27: #{tpu_custom_call.1} parent=19 // pred_region
          %s229 = sand.u32 %s20, 1
          %s230 = scalar_lea.sflag [#allocation7], %s229
          %s231 = sand.u32 %s68, 1
          %s232 = smul.addr %s231, 128
          %s233 = scalar_lea.vmem [#allocation6], %s232
          %s234 = smul.u32 2, %s28
          %s236 = ssub.s32 2048, 2048
          %237 = vsyncadd %s230, %s236
          %s238 = smul.addr %s234, 64
          %s239 = scalar_lea.hbm %s1, %s238
          %s240 = sshll.u32 %s233, 4
          %s241 = int_to_ptr.vmem [resolvable:$true] %s240
          %246 = dma.hbm_to_vmem [thread:$0]  %s239, 2048, %s241, %s230, 256, 128, 8
        $region28: #{tpu_custom_call.1} parent=19 // pred_fallthru
          _
        // Predicated region
        $region29: #{tpu_custom_call.1} parent=19 // pred_check
          %p247 = pneg %p104
        $region30: #{tpu_custom_call.1} parent=19 // pred_check_branch
          %249 = sbr.rel (%p247) target = $region32
        $region31: #{tpu_custom_call.1} parent=19 // pred_region
          %s250 = smul.u32 2, %s28
          %p251 = scmp.lt.s32.totalorder %s250, 3
          %s252 = scalar_select %p251, %s250, 3
          %s253 = scalar_lea.vmem %s2, %s252
          %s254 = smul.u32 2, %s28
        $region32: #{tpu_custom_call.1} parent=19 // pred_fallthru
          _
        // Predicated region
        $region33: #{tpu_custom_call.1} parent=19 // pred_check
          %p255 = pneg %p130
        $region34: #{tpu_custom_call.1} parent=19 // pred_check_branch
          %257 = sbr.rel (%p255) target = $region36
        $region35: #{tpu_custom_call.1} parent=19 // pred_region
          %s258 = sand.u32 %s20, 1
          %s259 = scalar_lea.sflag [#allocation7], %s258
          %s260 = sand.u32 %s120, 1
          %s261 = smul.addr %s260, 128
          %s262 = scalar_lea.vmem [#allocation8], %s261
          %s263 = smul.u32 32, %s28
          %s265 = ssub.s32 2048, 2048
          %266 = vsyncadd %s259, %s265
          %s267 = smul.addr %s263, 64
          %s268 = scalar_lea.hbm %s3, %s267
          %s269 = sshll.u32 %s262, 4
          %s270 = int_to_ptr.vmem [resolvable:$true] %s269
          %275 = dma.hbm_to_vmem [thread:$0]  %s268, 2048, %s270, %s259, 64, 64, 4
        $region36: #{tpu_custom_call.1} parent=19 // pred_fallthru
          _
      $region20: #{tpu_custom_call.1} parent=5 // pred_fallthru
        _
      %p276 = scmp.le.s32.totalorder 1, %s20
      %p277 = scmp.lt.s32.totalorder %s20, 5
      %p278 = pnand %p276, %p277
      %p279 = pneg %p278
      // Predicated region
      $region37: #{tpu_custom_call.1} parent=5 // pred_check
        _
      $region38: #{tpu_custom_call.1} parent=5 // pred_check_branch
        %281 = sbr.rel (%p278) target = $region40
      $region39: #{tpu_custom_call.1} parent=5 // pred_region
        %s282 = ssub.s32 %s20, 1
        %s283 = sand.u32 %s45, 1
        %s284 = scalar_lea.sflag [#allocation4], %s283
        %s285 = sand.u32 %s45, 1
        %s286 = smul.addr %s285, 64
        %s287 = scalar_lea.vmem [#allocation3], %s286
        // Predicated region
        $region41: #{tpu_custom_call.1} parent=39 // pred_check
          %p288 = pneg %p58
        $region42: #{tpu_custom_call.1} parent=39 // pred_check_branch
          %290 = sbr.rel (%p288) target = $region44
        $region43: #{tpu_custom_call.1} parent=39 // pred_region
          %291 = dma.done %s284, 1024
        $region44: #{tpu_custom_call.1} parent=39 // pred_fallthru
          _
        %s292 = sand.u32 %s25, 1
        %s293 = scalar_lea.sflag [#allocation7], %s292
        %s294 = sand.u32 %s71, 1
        %s295 = smul.addr %s294, 128
        %s296 = scalar_lea.vmem [#allocation6], %s295
        // Predicated region
        $region45: #{tpu_custom_call.1} parent=39 // pred_check
          %p297 = pneg %p84
        $region46: #{tpu_custom_call.1} parent=39 // pred_check_branch
          %299 = sbr.rel (%p297) target = $region48
        $region47: #{tpu_custom_call.1} parent=39 // pred_region
          %300 = dma.done %s293, 2048
        $region48: #{tpu_custom_call.1} parent=39 // pred_fallthru
          _
        %s301 = sand.u32 %s25, 1
        %s302 = scalar_lea.sflag [#allocation7], %s301
        %s303 = sand.u32 %s123, 1
        %s304 = smul.addr %s303, 128
        %s305 = scalar_lea.vmem [#allocation8], %s304
        // Predicated region
        $region49: #{tpu_custom_call.1} parent=39 // pred_check
          %p306 = pneg %p136
        $region50: #{tpu_custom_call.1} parent=39 // pred_check_branch
          %308 = sbr.rel (%p306) target = $region52
        $region51: #{tpu_custom_call.1} parent=39 // pred_region
          %309 = dma.done %s302, 2048
        $region52: #{tpu_custom_call.1} parent=39 // pred_fallthru
          _
        %s310 = sand.u32 %s45, 1
        %s311 = scalar_lea.sflag [#allocation4], %s310
        %s312 = sand.u32 %s45, 1
        %s313 = smul.addr %s312, 64
        %s314 = scalar_lea.vmem [#allocation3], %s313
        %p315 = pneg %p58
        %p316 = pneg %p55
        %s317 = sand.u32 %s25, 1
        %s318 = scalar_lea.sflag [#allocation7], %s317
        %s319 = sand.u32 %s71, 1
        %s320 = smul.addr %s319, 128
        %s321 = scalar_lea.vmem [#allocation6], %s320
        %p322 = pneg %p84
        %p323 = pneg %p81
        %s324 = smul.u32 2, %s30
        %p325 = scmp.lt.s32.totalorder %s324, 3
        %s326 = scalar_select %p325, %s324, 3
        %s327 = scalar_lea.vmem %s2, %s326
        %p328 = pneg %p110
        %p329 = pneg %p107
        %s330 = sand.u32 %s25, 1
        %s331 = scalar_lea.sflag [#allocation7], %s330
        %s332 = sand.u32 %s123, 1
        %s333 = smul.addr %s332, 128
        %s334 = scalar_lea.vmem [#allocation8], %s333
        %p335 = pneg %p136
        %p336 = pneg %p133
        %p337 = pneg %p157
        %p338 = pneg %p154
        %p339 = pneg %p183
        %p340 = pneg %p180
        %s341 = sand.u32 %s170, 1
        %s342 = scalar_lea.sflag [#allocation5], %s341
        %s343 = sand.u32 %s170, 1
        %s344 = smul.addr %s343, 128
        %s345 = scalar_lea.vmem [#allocation9], %s344
        %s346 = smul.u32 16, %s29
        %s347 = smul.u32 2, %s30
        %s348 = smul.u32 2, %s30
        %p349 = scmp.lt.s32.totalorder %s348, 3
        %s350 = scalar_select %p349, %s348, 3
        %s351 = scalar_lea.vmem %s2, %s350
        %s352 = smul.u32 2, %s30
        %s353 = smul.u32 32, %s30
        %s354 = smul.u32 16, %s29
        %p356 = scmp.eq.s32.totalorder %s30, 0
        // Predicated region
        $region53: #{tpu_custom_call.1} parent=39 // pred_check
          %p357 = pneg %p356
        $region54: #{tpu_custom_call.1} parent=39 // pred_check_branch
          %359 = sbr.rel (%p357) target = $region56
        $region55: #{tpu_custom_call.1} parent=39 // pred_region
          %360 = vst [vmem:[#allocation2] sm:$0xff] 0.0
          %361 = vst [vmem:[#allocation2 + $0x8] sm:$0xff] 0.0
          %362 = vst [vmem:[#allocation2 + $0x10] sm:$0xff] 0.0
          %363 = vst [vmem:[#allocation2 + $0x18] sm:$0xff] 0.0
          %364 = vst [vmem:[#allocation2 + $0x20] sm:$0xff] 0.0
          %365 = vst [vmem:[#allocation2 + $0x28] sm:$0xff] 0.0
          %366 = vst [vmem:[#allocation2 + $0x30] sm:$0xff] 0.0
          %367 = vst [vmem:[#allocation2 + $0x38] sm:$0xff] 0.0
          %368 = vst [vmem:[#allocation2 + $0x40] sm:$0xff] 0.0
          %369 = vst [vmem:[#allocation2 + $0x48] sm:$0xff] 0.0
          %370 = vst [vmem:[#allocation2 + $0x50] sm:$0xff] 0.0
          %371 = vst [vmem:[#allocation2 + $0x58] sm:$0xff] 0.0
          %372 = vst [vmem:[#allocation2 + $0x60] sm:$0xff] 0.0
          %373 = vst [vmem:[#allocation2 + $0x68] sm:$0xff] 0.0
          %374 = vst [vmem:[#allocation2 + $0x70] sm:$0xff] 0.0
          %375 = vst [vmem:[#allocation2 + $0x78] sm:$0xff] 0.0
        $region56: #{tpu_custom_call.1} parent=39 // pred_fallthru
          _
        %v376 = vld [vmem:[%s287] sm:$0xf]
        %v377 = vld [vmem:[%s287 + $0x4] sm:$0xf]
        %v378 = vld [vmem:[%s287 + $0x8] sm:$0xf]
        %v379 = vld [vmem:[%s287 + $0xc] sm:$0xf]
        %v380 = vld [vmem:[%s287 + $0x10] sm:$0xf]
        %v381 = vld [vmem:[%s287 + $0x14] sm:$0xf]
        %v382 = vld [vmem:[%s287 + $0x18] sm:$0xf]
        %v383 = vld [vmem:[%s287 + $0x1c] sm:$0xf]
        %v384 = vld [vmem:[%s287 + $0x20] sm:$0xf]
        %v385 = vld [vmem:[%s287 + $0x24] sm:$0xf]
        %v386 = vld [vmem:[%s287 + $0x28] sm:$0xf]
        %v387 = vld [vmem:[%s287 + $0x2c] sm:$0xf]
        %v388 = vld [vmem:[%s287 + $0x30] sm:$0xf]
        %v389 = vld [vmem:[%s287 + $0x34] sm:$0xf]
        %v390 = vld [vmem:[%s287 + $0x38] sm:$0xf]
        %v391 = vld [vmem:[%s287 + $0x3c] sm:$0xf]
        %v392 = vld [vmem:[%s296] sm:$0xff]
        %v393 = vld [vmem:[%s296 + $0x8] sm:$0xff]
        %v394 = vld [vmem:[%s296 + $0x10] sm:$0xff]
        %v395 = vld [vmem:[%s296 + $0x18] sm:$0xff]
        %v396 = vld [vmem:[%s296 + $0x20] sm:$0xff]
        %v397 = vld [vmem:[%s296 + $0x28] sm:$0xff]
        %v398 = vld [vmem:[%s296 + $0x30] sm:$0xff]
        %v399 = vld [vmem:[%s296 + $0x38] sm:$0xff]
        %v400 = vld [vmem:[%s296 + $0x40] sm:$0xff]
        %v401 = vld [vmem:[%s296 + $0x48] sm:$0xff]
        %v402 = vld [vmem:[%s296 + $0x50] sm:$0xff]
        %v403 = vld [vmem:[%s296 + $0x58] sm:$0xff]
        %v404 = vld [vmem:[%s296 + $0x60] sm:$0xff]
        %v405 = vld [vmem:[%s296 + $0x68] sm:$0xff]
        %v406 = vld [vmem:[%s296 + $0x70] sm:$0xff]
        %v407 = vld [vmem:[%s296 + $0x78] sm:$0xff]
        %v408 = vld [vmem:[%s351] sm:$0x3]
        %v410 = vlaneseq
        %v411 = vshrl.u32 %v410, 7
        %v412 = vsub.s32 0, %v411
        %v413 = vrot.slane %v408, %v412
        %v414 = vlaneseq
        %v415 = vshrl.u32 %v414, 7
        %v416 = vsub.s32 1, %v415
        %v417 = vrot.slane %v408, %v416
        %v436 = vunpack.c.l.b16 %v376
        %v437 = vunpack.c.l.b16 %v377
        %v438 = vunpack.c.l.b16 %v378
        %v439 = vunpack.c.l.b16 %v379
        %v440 = vunpack.c.l.b16 %v380
        %v441 = vunpack.c.l.b16 %v381
        %v442 = vunpack.c.l.b16 %v382
        %v443 = vunpack.c.l.b16 %v383
        %v444 = vunpack.c.l.b16 %v384
        %v445 = vunpack.c.l.b16 %v385
        %v446 = vunpack.c.l.b16 %v386
        %v447 = vunpack.c.l.b16 %v387
        %v448 = vunpack.c.l.b16 %v388
        %v449 = vunpack.c.l.b16 %v389
        %v450 = vunpack.c.l.b16 %v390
        %v451 = vunpack.c.l.b16 %v391
        %v452 = vpack.c.b16 %v437, %v436
        %v453 = vpack.c.b16 %v439, %v438
        %v454 = vpack.c.b16 %v441, %v440
        %v455 = vpack.c.b16 %v443, %v442
        %v456 = vpack.c.b16 %v445, %v444
        %v457 = vpack.c.b16 %v447, %v446
        %v458 = vpack.c.b16 %v449, %v448
        %v459 = vpack.c.b16 %v451, %v450
        %v484 = vunpack.c.l.b16 %v392
        %v485 = vunpack.c.h.b16 %v392
        %v486 = vunpack.c.l.b16 %v393
        %v487 = vunpack.c.h.b16 %v393
        %v488 = vunpack.c.l.b16 %v394
        %v489 = vunpack.c.h.b16 %v394
        %v490 = vunpack.c.l.b16 %v395
        %v491 = vunpack.c.h.b16 %v395
        %v492 = vunpack.c.l.b16 %v396
        %v493 = vunpack.c.h.b16 %v396
        %v494 = vunpack.c.l.b16 %v397
        %v495 = vunpack.c.h.b16 %v397
        %v496 = vunpack.c.l.b16 %v398
        %v497 = vunpack.c.h.b16 %v398
        %v498 = vunpack.c.l.b16 %v399
        %v499 = vunpack.c.h.b16 %v399
        %v500 = vunpack.c.l.b16 %v400
        %v501 = vunpack.c.h.b16 %v400
        %v502 = vunpack.c.l.b16 %v401
        %v503 = vunpack.c.h.b16 %v401
        %v504 = vunpack.c.l.b16 %v402
        %v505 = vunpack.c.h.b16 %v402
        %v506 = vunpack.c.l.b16 %v403
        %v507 = vunpack.c.h.b16 %v403
        %v508 = vunpack.c.l.b16 %v404
        %v509 = vunpack.c.h.b16 %v404
        %v510 = vunpack.c.l.b16 %v405
        %v511 = vunpack.c.h.b16 %v405
        %v512 = vunpack.c.l.b16 %v406
        %v513 = vunpack.c.h.b16 %v406
        %v514 = vunpack.c.l.b16 %v407
        %v515 = vunpack.c.h.b16 %v407
        %v516 = vpack.c.b16 %v486, %v484
        %v517 = vpack.c.b16 %v487, %v485
        %v518 = vpack.c.b16 %v490, %v488
        %v519 = vpack.c.b16 %v491, %v489
        %v520 = vpack.c.b16 %v494, %v492
        %v521 = vpack.c.b16 %v495, %v493
        %v522 = vpack.c.b16 %v498, %v496
        %v523 = vpack.c.b16 %v499, %v497
        %v524 = vpack.c.b16 %v502, %v500
        %v525 = vpack.c.b16 %v503, %v501
        %v526 = vpack.c.b16 %v506, %v504
        %v527 = vpack.c.b16 %v507, %v505
        %v528 = vpack.c.b16 %v510, %v508
        %v529 = vpack.c.b16 %v511, %v509
        %v530 = vpack.c.b16 %v514, %v512
        %v531 = vpack.c.b16 %v515, %v513
        %548 = vmatprep.subr.bf16.mxu0 %v517
        %549 = vmatpush1.bf16.msra.mxu0 %v516
        %550 = vmatprep.subr.bf16.mxu0 %v519
        %551 = vmatpush1.bf16.msra.mxu0 %v518
        %552 = vmatprep.subr.bf16.mxu0 %v521
        %553 = vmatpush1.bf16.msra.mxu0 %v520
        %554 = vmatprep.subr.bf16.mxu0 %v523
        %555 = vmatpush1.bf16.msra.mxu0 %v522
        %556 = vmatprep.subr.bf16.mxu0 %v525
        %557 = vmatpush1.bf16.msra.mxu0 %v524
        %558 = vmatprep.subr.bf16.mxu0 %v527
        %559 = vmatpush1.bf16.msra.mxu0 %v526
        %560 = vmatprep.subr.bf16.mxu0 %v529
        %561 = vmatpush1.bf16.msra.mxu0 %v528
        %562 = vmatprep.subr.bf16.mxu0 %v531
        %563 = vmatpush1.bf16.msra.mxu0 %v530
        %564 = vmatprep.subr.bf16.mxu0 0
        %565 = vmatpush1.bf16.msra.mxu0 0
        %566 = vmatprep.subr.bf16.mxu0 0
        %567 = vmatpush1.bf16.msra.mxu0 0
        %568 = vmatprep.subr.bf16.mxu0 0
        %569 = vmatpush1.bf16.msra.mxu0 0
        %570 = vmatprep.subr.bf16.mxu0 0
        %571 = vmatpush1.bf16.msra.mxu0 0
        %572 = vmatprep.subr.bf16.mxu0 0
        %573 = vmatpush1.bf16.msra.mxu0 0
        %574 = vmatprep.subr.bf16.mxu0 0
        %575 = vmatpush1.bf16.msra.mxu0 0
        %576 = vmatprep.subr.bf16.mxu0 0
        %577 = vmatpush1.bf16.msra.mxu0 0
        %578 = vmatprep.subr.bf16.mxu0 0
        %579 = vmatpush1.bf16.msra.mxu0 0
        %580 = vmatprep.mubr.bf16.mxu0 0
        %581 = vmatmul.mubr.bf16.gmra.mrb[0].mxu0 %v452
        %v582 = vpop.f32.mrb[0].mxu0
        %v583 = vadd.f32 %v413, %v582
        %v584 = vpop.f32.mrb[0].mxu0
        %v585 = vadd.f32 %v417, %v584
        %v586 = vpop.f32.mrb[0].mxu0
        %v587 = vadd.f32 %v413, %v586
        %v588 = vpop.f32.mrb[0].mxu0
        %v589 = vadd.f32 %v417, %v588
        %590 = vmatprep.mubr.bf16.mxu0 0
        %591 = vmatmul.mubr.bf16.gmra.mrb[0].mxu0 %v453
        %v592 = vpop.f32.mrb[0].mxu0
        %v593 = vadd.f32 %v413, %v592
        %v594 = vpop.f32.mrb[0].mxu0
        %v595 = vadd.f32 %v417, %v594
        %v596 = vpop.f32.mrb[0].mxu0
        %v597 = vadd.f32 %v413, %v596
        %v598 = vpop.f32.mrb[0].mxu0
        %v599 = vadd.f32 %v417, %v598
        %600 = vmatprep.mubr.bf16.mxu0 0
        %601 = vmatmul.mubr.bf16.gmra.mrb[0].mxu0 %v454
        %v602 = vpop.f32.mrb[0].mxu0
        %v603 = vadd.f32 %v413, %v602
        %v604 = vpop.f32.mrb[0].mxu0
        %v605 = vadd.f32 %v417, %v604
        %v606 = vpop.f32.mrb[0].mxu0
        %v607 = vadd.f32 %v413, %v606
        %v608 = vpop.f32.mrb[0].mxu0
        %v609 = vadd.f32 %v417, %v608
        %610 = vmatprep.mubr.bf16.mxu0 0
        %611 = vmatmul.mubr.bf16.gmra.mrb[0].mxu0 %v455
        %v612 = vpop.f32.mrb[0].mxu0
        %v613 = vadd.f32 %v413, %v612
        %v614 = vpop.f32.mrb[0].mxu0
        %v615 = vadd.f32 %v417, %v614
        %v616 = vpop.f32.mrb[0].mxu0
        %v617 = vadd.f32 %v413, %v616
        %v618 = vpop.f32.mrb[0].mxu0
        %v619 = vadd.f32 %v417, %v618
        %620 = vmatprep.mubr.bf16.mxu0 0
        %621 = vmatmul.mubr.bf16.gmra.mrb[0].mxu0 %v456
        %v622 = vpop.f32.mrb[0].mxu0
        %v623 = vadd.f32 %v413, %v622
        %v624 = vpop.f32.mrb[0].mxu0
        %v625 = vadd.f32 %v417, %v624
        %v626 = vpop.f32.mrb[0].mxu0
        %v627 = vadd.f32 %v413, %v626
        %v628 = vpop.f32.mrb[0].mxu0
        %v629 = vadd.f32 %v417, %v628
        %630 = vmatprep.mubr.bf16.mxu0 0
        %631 = vmatmul.mubr.bf16.gmra.mrb[0].mxu0 %v457
        %v632 = vpop.f32.mrb[0].mxu0
        %v633 = vadd.f32 %v413, %v632
        %v634 = vpop.f32.mrb[0].mxu0
        %v635 = vadd.f32 %v417, %v634
        %v636 = vpop.f32.mrb[0].mxu0
        %v637 = vadd.f32 %v413, %v636
        %v638 = vpop.f32.mrb[0].mxu0
        %v639 = vadd.f32 %v417, %v638
        %640 = vmatprep.mubr.bf16.mxu0 0
        %641 = vmatmul.mubr.bf16.gmra.mrb[0].mxu0 %v458
        %v642 = vpop.f32.mrb[0].mxu0
        %v643 = vadd.f32 %v413, %v642
        %v644 = vpop.f32.mrb[0].mxu0
        %v645 = vadd.f32 %v417, %v644
        %v646 = vpop.f32.mrb[0].mxu0
        %v647 = vadd.f32 %v413, %v646
        %v648 = vpop.f32.mrb[0].mxu0
        %v649 = vadd.f32 %v417, %v648
        %650 = vmatprep.mubr.bf16.mxu0 0
        %651 = vmatmul.mubr.bf16.gmra.mrb[0].mxu0 %v459
        %v652 = vpop.f32.mrb[0].mxu0
        %v653 = vadd.f32 %v413, %v652
        %v654 = vpop.f32.mrb[0].mxu0
        %v655 = vadd.f32 %v417, %v654
        %v656 = vpop.f32.mrb[0].mxu0
        %v657 = vadd.f32 %v413, %v656
        %v658 = vpop.f32.mrb[0].mxu0
        %v659 = vadd.f32 %v417, %v658
        %660 = vdwg.mxu0
        %v661 = vmul.f32 %v583, 0.5
        %v662 = vmul.f32 %v585, 0.5
        %v663 = vmul.f32 %v587, 0.5
        %v664 = vmul.f32 %v589, 0.5
        %v665 = vmul.f32 %v593, 0.5
        %v666 = vmul.f32 %v595, 0.5
        %v667 = vmul.f32 %v597, 0.5
        %v668 = vmul.f32 %v599, 0.5
        %v669 = vmul.f32 %v603, 0.5
        %v670 = vmul.f32 %v605, 0.5
        %v671 = vmul.f32 %v607, 0.5
        %v672 = vmul.f32 %v609, 0.5
        %v673 = vmul.f32 %v613, 0.5
        %v674 = vmul.f32 %v615, 0.5
        %v675 = vmul.f32 %v617, 0.5
        %v676 = vmul.f32 %v619, 0.5
        %v677 = vmul.f32 %v623, 0.5
        %v678 = vmul.f32 %v625, 0.5
        %v679 = vmul.f32 %v627, 0.5
        %v680 = vmul.f32 %v629, 0.5
        %v681 = vmul.f32 %v633, 0.5
        %v682 = vmul.f32 %v635, 0.5
        %v683 = vmul.f32 %v637, 0.5
        %v684 = vmul.f32 %v639, 0.5
        %v685 = vmul.f32 %v643, 0.5
        %v686 = vmul.f32 %v645, 0.5
        %v687 = vmul.f32 %v647, 0.5
        %v688 = vmul.f32 %v649, 0.5
        %v689 = vmul.f32 %v653, 0.5
        %v690 = vmul.f32 %v655, 0.5
        %v691 = vmul.f32 %v657, 0.5
        %v692 = vmul.f32 %v659, 0.5
        %v693 = vmul.f32 %v583, 0.044715
        %v694 = vmul.f32 %v585, 0.044715
        %v695 = vmul.f32 %v587, 0.044715
        %v696 = vmul.f32 %v589, 0.044715
        %v697 = vmul.f32 %v593, 0.044715
        %v698 = vmul.f32 %v595, 0.044715
        %v699 = vmul.f32 %v597, 0.044715
        %v700 = vmul.f32 %v599, 0.044715
        %v701 = vmul.f32 %v603, 0.044715
        %v702 = vmul.f32 %v605, 0.044715
        %v703 = vmul.f32 %v607, 0.044715
        %v704 = vmul.f32 %v609, 0.044715
        %v705 = vmul.f32 %v613, 0.044715
        %v706 = vmul.f32 %v615, 0.044715
        %v707 = vmul.f32 %v617, 0.044715
        %v708 = vmul.f32 %v619, 0.044715
        %v709 = vmul.f32 %v623, 0.044715
        %v710 = vmul.f32 %v625, 0.044715
        %v711 = vmul.f32 %v627, 0.044715
        %v712 = vmul.f32 %v629, 0.044715
        %v713 = vmul.f32 %v633, 0.044715
        %v714 = vmul.f32 %v635, 0.044715
        %v715 = vmul.f32 %v637, 0.044715
        %v716 = vmul.f32 %v639, 0.044715
        %v717 = vmul.f32 %v643, 0.044715
        %v718 = vmul.f32 %v645, 0.044715
        %v719 = vmul.f32 %v647, 0.044715
        %v720 = vmul.f32 %v649, 0.044715
        %v721 = vmul.f32 %v653, 0.044715
        %v722 = vmul.f32 %v655, 0.044715
        %v723 = vmul.f32 %v657, 0.044715
        %v724 = vmul.f32 %v659, 0.044715
        %v725 = vmul.f32 %v693, %v583
        %v726 = vmul.f32 %v694, %v585
        %v727 = vmul.f32 %v695, %v587
        %v728 = vmul.f32 %v696, %v589
        %v729 = vmul.f32 %v697, %v593
        %v730 = vmul.f32 %v698, %v595
        %v731 = vmul.f32 %v699, %v597
        %v732 = vmul.f32 %v700, %v599
        %v733 = vmul.f32 %v701, %v603
        %v734 = vmul.f32 %v702, %v605
        %v735 = vmul.f32 %v703, %v607
        %v736 = vmul.f32 %v704, %v609
        %v737 = vmul.f32 %v705, %v613
        %v738 = vmul.f32 %v706, %v615
        %v739 = vmul.f32 %v707, %v617
        %v740 = vmul.f32 %v708, %v619
        %v741 = vmul.f32 %v709, %v623
        %v742 = vmul.f32 %v710, %v625
        %v743 = vmul.f32 %v711, %v627
        %v744 = vmul.f32 %v712, %v629
        %v745 = vmul.f32 %v713, %v633
        %v746 = vmul.f32 %v714, %v635
        %v747 = vmul.f32 %v715, %v637
        %v748 = vmul.f32 %v716, %v639
        %v749 = vmul.f32 %v717, %v643
        %v750 = vmul.f32 %v718, %v645
        %v751 = vmul.f32 %v719, %v647
        %v752 = vmul.f32 %v720, %v649
        %v753 = vmul.f32 %v721, %v653
        %v754 = vmul.f32 %v722, %v655
        %v755 = vmul.f32 %v723, %v657
        %v756 = vmul.f32 %v724, %v659
        %v757 = vmul.f32 %v725, %v583
        %v758 = vmul.f32 %v726, %v585
        %v759 = vmul.f32 %v727, %v587
        %v760 = vmul.f32 %v728, %v589
        %v761 = vmul.f32 %v729, %v593
        %v762 = vmul.f32 %v730, %v595
        %v763 = vmul.f32 %v731, %v597
        %v764 = vmul.f32 %v732, %v599
        %v765 = vmul.f32 %v733, %v603
        %v766 = vmul.f32 %v734, %v605
        %v767 = vmul.f32 %v735, %v607
        %v768 = vmul.f32 %v736, %v609
        %v769 = vmul.f32 %v737, %v613
        %v770 = vmul.f32 %v738, %v615
        %v771 = vmul.f32 %v739, %v617
        %v772 = vmul.f32 %v740, %v619
        %v773 = vmul.f32 %v741, %v623
        %v774 = vmul.f32 %v742, %v625
        %v775 = vmul.f32 %v743, %v627
        %v776 = vmul.f32 %v744, %v629
        %v777 = vmul.f32 %v745, %v633
        %v778 = vmul.f32 %v746, %v635
        %v779 = vmul.f32 %v747, %v637
        %v780 = vmul.f32 %v748, %v639
        %v781 = vmul.f32 %v749, %v643
        %v782 = vmul.f32 %v750, %v645
        %v783 = vmul.f32 %v751, %v647
        %v784 = vmul.f32 %v752, %v649
        %v785 = vmul.f32 %v753, %v653
        %v786 = vmul.f32 %v754, %v655
        %v787 = vmul.f32 %v755, %v657
        %v788 = vmul.f32 %v756, %v659
        %v789 = vadd.f32 %v583, %v757
        %v790 = vadd.f32 %v585, %v758
        %v791 = vadd.f32 %v587, %v759
        %v792 = vadd.f32 %v589, %v760
        %v793 = vadd.f32 %v593, %v761
        %v794 = vadd.f32 %v595, %v762
        %v795 = vadd.f32 %v597, %v763
        %v796 = vadd.f32 %v599, %v764
        %v797 = vadd.f32 %v603, %v765
        %v798 = vadd.f32 %v605, %v766
        %v799 = vadd.f32 %v607, %v767
        %v800 = vadd.f32 %v609, %v768
        %v801 = vadd.f32 %v613, %v769
        %v802 = vadd.f32 %v615, %v770
        %v803 = vadd.f32 %v617, %v771
        %v804 = vadd.f32 %v619, %v772
        %v805 = vadd.f32 %v623, %v773
        %v806 = vadd.f32 %v625, %v774
        %v807 = vadd.f32 %v627, %v775
        %v808 = vadd.f32 %v629, %v776
        %v809 = vadd.f32 %v633, %v777
        %v810 = vadd.f32 %v635, %v778
        %v811 = vadd.f32 %v637, %v779
        %v812 = vadd.f32 %v639, %v780
        %v813 = vadd.f32 %v643, %v781
        %v814 = vadd.f32 %v645, %v782
        %v815 = vadd.f32 %v647, %v783
        %v816 = vadd.f32 %v649, %v784
        %v817 = vadd.f32 %v653, %v785
        %v818 = vadd.f32 %v655, %v786
        %v819 = vadd.f32 %v657, %v787
        %v820 = vadd.f32 %v659, %v788
        %v821 = vmul.f32 %v789, 0.7978846
        %v822 = vmul.f32 %v790, 0.7978846
        %v823 = vmul.f32 %v791, 0.7978846
        %v824 = vmul.f32 %v792, 0.7978846
        %v825 = vmul.f32 %v793, 0.7978846
        %v826 = vmul.f32 %v794, 0.7978846
        %v827 = vmul.f32 %v795, 0.7978846
        %v828 = vmul.f32 %v796, 0.7978846
        %v829 = vmul.f32 %v797, 0.7978846
        %v830 = vmul.f32 %v798, 0.7978846
        %v831 = vmul.f32 %v799, 0.7978846
        %v832 = vmul.f32 %v800, 0.7978846
        %v833 = vmul.f32 %v801, 0.7978846
        %v834 = vmul.f32 %v802, 0.7978846
        %v835 = vmul.f32 %v803, 0.7978846
        %v836 = vmul.f32 %v804, 0.7978846
        %v837 = vmul.f32 %v805, 0.7978846
        %v838 = vmul.f32 %v806, 0.7978846
        %v839 = vmul.f32 %v807, 0.7978846
        %v840 = vmul.f32 %v808, 0.7978846
        %v841 = vmul.f32 %v809, 0.7978846
        %v842 = vmul.f32 %v810, 0.7978846
        %v843 = vmul.f32 %v811, 0.7978846
        %v844 = vmul.f32 %v812, 0.7978846
        %v845 = vmul.f32 %v813, 0.7978846
        %v846 = vmul.f32 %v814, 0.7978846
        %v847 = vmul.f32 %v815, 0.7978846
        %v848 = vmul.f32 %v816, 0.7978846
        %v849 = vmul.f32 %v817, 0.7978846
        %v850 = vmul.f32 %v818, 0.7978846
        %v851 = vmul.f32 %v819, 0.7978846
        %v852 = vmul.f32 %v820, 0.7978846
        %v853 = vtanh.pop %v821
        %v854 = vtanh.pop %v822
        %v855 = vtanh.pop %v823
        %v856 = vtanh.pop %v824
        %v857 = vtanh.pop %v825
        %v858 = vtanh.pop %v826
        %v859 = vtanh.pop %v827
        %v860 = vtanh.pop %v828
        %v861 = vtanh.pop %v829
        %v862 = vtanh.pop %v830
        %v863 = vtanh.pop %v831
        %v864 = vtanh.pop %v832
        %v865 = vtanh.pop %v833
        %v866 = vtanh.pop %v834
        %v867 = vtanh.pop %v835
        %v868 = vtanh.pop %v836
        %v869 = vtanh.pop %v837
        %v870 = vtanh.pop %v838
        %v871 = vtanh.pop %v839
        %v872 = vtanh.pop %v840
        %v873 = vtanh.pop %v841
        %v874 = vtanh.pop %v842
        %v875 = vtanh.pop %v843
        %v876 = vtanh.pop %v844
        %v877 = vtanh.pop %v845
        %v878 = vtanh.pop %v846
        %v879 = vtanh.pop %v847
        %v880 = vtanh.pop %v848
        %v881 = vtanh.pop %v849
        %v882 = vtanh.pop %v850
        %v883 = vtanh.pop %v851
        %v884 = vtanh.pop %v852
        %v885 = vadd.f32 %v853, 1.0
        %v886 = vadd.f32 %v854, 1.0
        %v887 = vadd.f32 %v855, 1.0
        %v888 = vadd.f32 %v856, 1.0
        %v889 = vadd.f32 %v857, 1.0
        %v890 = vadd.f32 %v858, 1.0
        %v891 = vadd.f32 %v859, 1.0
        %v892 = vadd.f32 %v860, 1.0
        %v893 = vadd.f32 %v861, 1.0
        %v894 = vadd.f32 %v862, 1.0
        %v895 = vadd.f32 %v863, 1.0
        %v896 = vadd.f32 %v864, 1.0
        %v897 = vadd.f32 %v865, 1.0
        %v898 = vadd.f32 %v866, 1.0
        %v899 = vadd.f32 %v867, 1.0
        %v900 = vadd.f32 %v868, 1.0
        %v901 = vadd.f32 %v869, 1.0
        %v902 = vadd.f32 %v870, 1.0
        %v903 = vadd.f32 %v871, 1.0
        %v904 = vadd.f32 %v872, 1.0
        %v905 = vadd.f32 %v873, 1.0
        %v906 = vadd.f32 %v874, 1.0
        %v907 = vadd.f32 %v875, 1.0
        %v908 = vadd.f32 %v876, 1.0
        %v909 = vadd.f32 %v877, 1.0
        %v910 = vadd.f32 %v878, 1.0
        %v911 = vadd.f32 %v879, 1.0
        %v912 = vadd.f32 %v880, 1.0
        %v913 = vadd.f32 %v881, 1.0
        %v914 = vadd.f32 %v882, 1.0
        %v915 = vadd.f32 %v883, 1.0
        %v916 = vadd.f32 %v884, 1.0
        %v917 = vmul.f32 %v661, %v885
        %v918 = vmul.f32 %v662, %v886
        %v919 = vmul.f32 %v663, %v887
        %v920 = vmul.f32 %v664, %v888
        %v921 = vmul.f32 %v665, %v889
        %v922 = vmul.f32 %v666, %v890
        %v923 = vmul.f32 %v667, %v891
        %v924 = vmul.f32 %v668, %v892
        %v925 = vmul.f32 %v669, %v893
        %v926 = vmul.f32 %v670, %v894
        %v927 = vmul.f32 %v671, %v895
        %v928 = vmul.f32 %v672, %v896
        %v929 = vmul.f32 %v673, %v897
        %v930 = vmul.f32 %v674, %v898
        %v931 = vmul.f32 %v675, %v899
        %v932 = vmul.f32 %v676, %v900
        %v933 = vmul.f32 %v677, %v901
        %v934 = vmul.f32 %v678, %v902
        %v935 = vmul.f32 %v679, %v903
        %v936 = vmul.f32 %v680, %v904
        %v937 = vmul.f32 %v681, %v905
        %v938 = vmul.f32 %v682, %v906
        %v939 = vmul.f32 %v683, %v907
        %v940 = vmul.f32 %v684, %v908
        %v941 = vmul.f32 %v685, %v909
        %v942 = vmul.f32 %v686, %v910
        %v943 = vmul.f32 %v687, %v911
        %v944 = vmul.f32 %v688, %v912
        %v945 = vmul.f32 %v689, %v913
        %v946 = vmul.f32 %v690, %v914
        %v947 = vmul.f32 %v691, %v915
        %v948 = vmul.f32 %v692, %v916
        %v949 = vld [vmem:[#allocation2] sm:$0xff]
        %v950 = vld [vmem:[#allocation2 + $0x8] sm:$0xff]
        %v951 = vld [vmem:[#allocation2 + $0x10] sm:$0xff]
        %v952 = vld [vmem:[#allocation2 + $0x18] sm:$0xff]
        %v953 = vld [vmem:[#allocation2 + $0x20] sm:$0xff]
        %v954 = vld [vmem:[#allocation2 + $0x28] sm:$0xff]
        %v955 = vld [vmem:[#allocation2 + $0x30] sm:$0xff]
        %v956 = vld [vmem:[#allocation2 + $0x38] sm:$0xff]
        %v957 = vld [vmem:[#allocation2 + $0x40] sm:$0xff]
        %v958 = vld [vmem:[#allocation2 + $0x48] sm:$0xff]
        %v959 = vld [vmem:[#allocation2 + $0x50] sm:$0xff]
        %v960 = vld [vmem:[#allocation2 + $0x58] sm:$0xff]
        %v961 = vld [vmem:[#allocation2 + $0x60] sm:$0xff]
        %v962 = vld [vmem:[#allocation2 + $0x68] sm:$0xff]
        %v963 = vld [vmem:[#allocation2 + $0x70] sm:$0xff]
        %v964 = vld [vmem:[#allocation2 + $0x78] sm:$0xff]
        %v965 = vpack.c.bf16 %v919, %v917
        %v966 = vpack.c.bf16 %v920, %v918
        %v967 = vpack.c.bf16 %v923, %v921
        %v968 = vpack.c.bf16 %v924, %v922
        %v969 = vpack.c.bf16 %v927, %v925
        %v970 = vpack.c.bf16 %v928, %v926
        %v971 = vpack.c.bf16 %v931, %v929
        %v972 = vpack.c.bf16 %v932, %v930
        %v973 = vpack.c.bf16 %v935, %v933
        %v974 = vpack.c.bf16 %v936, %v934
        %v975 = vpack.c.bf16 %v939, %v937
        %v976 = vpack.c.bf16 %v940, %v938
        %v977 = vpack.c.bf16 %v943, %v941
        %v978 = vpack.c.bf16 %v944, %v942
        %v979 = vpack.c.bf16 %v947, %v945
        %v980 = vpack.c.bf16 %v948, %v946
        %v981 = vld [vmem:[%s305] sm:$0xf]
        %v982 = vld [vmem:[%s305 + $0x4] sm:$0xf]
        %v983 = vld [vmem:[%s305 + $0x8] sm:$0xf]
        %v984 = vld [vmem:[%s305 + $0xc] sm:$0xf]
        %v985 = vld [vmem:[%s305 + $0x10] sm:$0xf]
        %v986 = vld [vmem:[%s305 + $0x14] sm:$0xf]
        %v987 = vld [vmem:[%s305 + $0x18] sm:$0xf]
        %v988 = vld [vmem:[%s305 + $0x1c] sm:$0xf]
        %v989 = vld [vmem:[%s305 + $0x20] sm:$0xf]
        %v990 = vld [vmem:[%s305 + $0x24] sm:$0xf]
        %v991 = vld [vmem:[%s305 + $0x28] sm:$0xf]
        %v992 = vld [vmem:[%s305 + $0x2c] sm:$0xf]
        %v993 = vld [vmem:[%s305 + $0x30] sm:$0xf]
        %v994 = vld [vmem:[%s305 + $0x34] sm:$0xf]
        %v995 = vld [vmem:[%s305 + $0x38] sm:$0xf]
        %v996 = vld [vmem:[%s305 + $0x3c] sm:$0xf]
        %v997 = vld [vmem:[%s305 + $0x40] sm:$0xf]
        %v998 = vld [vmem:[%s305 + $0x44] sm:$0xf]
        %v999 = vld [vmem:[%s305 + $0x48] sm:$0xf]
        %v1000 = vld [vmem:[%s305 + $0x4c] sm:$0xf]
        %v1001 = vld [vmem:[%s305 + $0x50] sm:$0xf]
        %v1002 = vld [vmem:[%s305 + $0x54] sm:$0xf]
        %v1003 = vld [vmem:[%s305 + $0x58] sm:$0xf]
        %v1004 = vld [vmem:[%s305 + $0x5c] sm:$0xf]
        %v1005 = vld [vmem:[%s305 + $0x60] sm:$0xf]
        %v1006 = vld [vmem:[%s305 + $0x64] sm:$0xf]
        %v1007 = vld [vmem:[%s305 + $0x68] sm:$0xf]
        %v1008 = vld [vmem:[%s305 + $0x6c] sm:$0xf]
        %v1009 = vld [vmem:[%s305 + $0x70] sm:$0xf]
        %v1010 = vld [vmem:[%s305 + $0x74] sm:$0xf]
        %v1011 = vld [vmem:[%s305 + $0x78] sm:$0xf]
        %v1012 = vld [vmem:[%s305 + $0x7c] sm:$0xf]
        %v1045 = vunpack.c.l.b16 %v981
        %v1046 = vunpack.c.l.b16 %v982
        %v1047 = vunpack.c.l.b16 %v983
        %v1048 = vunpack.c.l.b16 %v984
        %v1049 = vunpack.c.l.b16 %v985
        %v1050 = vunpack.c.l.b16 %v986
        %v1051 = vunpack.c.l.b16 %v987
        %v1052 = vunpack.c.l.b16 %v988
        %v1053 = vunpack.c.l.b16 %v989
        %v1054 = vunpack.c.l.b16 %v990
        %v1055 = vunpack.c.l.b16 %v991
        %v1056 = vunpack.c.l.b16 %v992
        %v1057 = vunpack.c.l.b16 %v993
        %v1058 = vunpack.c.l.b16 %v994
        %v1059 = vunpack.c.l.b16 %v995
        %v1060 = vunpack.c.l.b16 %v996
        %v1061 = vunpack.c.l.b16 %v997
        %v1062 = vunpack.c.l.b16 %v998
        %v1063 = vunpack.c.l.b16 %v999
        %v1064 = vunpack.c.l.b16 %v1000
        %v1065 = vunpack.c.l.b16 %v1001
        %v1066 = vunpack.c.l.b16 %v1002
        %v1067 = vunpack.c.l.b16 %v1003
        %v1068 = vunpack.c.l.b16 %v1004
        %v1069 = vunpack.c.l.b16 %v1005
        %v1070 = vunpack.c.l.b16 %v1006
        %v1071 = vunpack.c.l.b16 %v1007
        %v1072 = vunpack.c.l.b16 %v1008
        %v1073 = vunpack.c.l.b16 %v1009
        %v1074 = vunpack.c.l.b16 %v1010
        %v1075 = vunpack.c.l.b16 %v1011
        %v1076 = vunpack.c.l.b16 %v1012
        %v1077 = vpack.c.b16 %v1046, %v1045
        %v1078 = vpack.c.b16 %v1048, %v1047
        %v1079 = vpack.c.b16 %v1050, %v1049
        %v1080 = vpack.c.b16 %v1052, %v1051
        %v1081 = vpack.c.b16 %v1054, %v1053
        %v1082 = vpack.c.b16 %v1056, %v1055
        %v1083 = vpack.c.b16 %v1058, %v1057
        %v1084 = vpack.c.b16 %v1060, %v1059
        %v1085 = vpack.c.b16 %v1062, %v1061
        %v1086 = vpack.c.b16 %v1064, %v1063
        %v1087 = vpack.c.b16 %v1066, %v1065
        %v1088 = vpack.c.b16 %v1068, %v1067
        %v1089 = vpack.c.b16 %v1070, %v1069
        %v1090 = vpack.c.b16 %v1072, %v1071
        %v1091 = vpack.c.b16 %v1074, %v1073
        %v1092 = vpack.c.b16 %v1076, %v1075
        %1109 = vmatprep.subr.bf16.mxu0 0
        %1110 = vmatpush1.bf16.msra.mxu0 %v1077
        %1111 = vmatprep.subr.bf16.mxu0 0
        %1112 = vmatpush1.bf16.msra.mxu0 %v1078
        %1113 = vmatprep.subr.bf16.mxu0 0
        %1114 = vmatpush1.bf16.msra.mxu0 %v1079
        %1115 = vmatprep.subr.bf16.mxu0 0
        %1116 = vmatpush1.bf16.msra.mxu0 %v1080
        %1117 = vmatprep.subr.bf16.mxu0 0
        %1118 = vmatpush1.bf16.msra.mxu0 %v1081
        %1119 = vmatprep.subr.bf16.mxu0 0
        %1120 = vmatpush1.bf16.msra.mxu0 %v1082
        %1121 = vmatprep.subr.bf16.mxu0 0
        %1122 = vmatpush1.bf16.msra.mxu0 %v1083
        %1123 = vmatprep.subr.bf16.mxu0 0
        %1124 = vmatpush1.bf16.msra.mxu0 %v1084
        %1125 = vmatprep.subr.bf16.mxu0 0
        %1126 = vmatpush1.bf16.msra.mxu0 %v1085
        %1127 = vmatprep.subr.bf16.mxu0 0
        %1128 = vmatpush1.bf16.msra.mxu0 %v1086
        %1129 = vmatprep.subr.bf16.mxu0 0
        %1130 = vmatpush1.bf16.msra.mxu0 %v1087
        %1131 = vmatprep.subr.bf16.mxu0 0
        %1132 = vmatpush1.bf16.msra.mxu0 %v1088
        %1133 = vmatprep.subr.bf16.mxu0 0
        %1134 = vmatpush1.bf16.msra.mxu0 %v1089
        %1135 = vmatprep.subr.bf16.mxu0 0
        %1136 = vmatpush1.bf16.msra.mxu0 %v1090
        %1137 = vmatprep.subr.bf16.mxu0 0
        %1138 = vmatpush1.bf16.msra.mxu0 %v1091
        %1139 = vmatprep.subr.bf16.mxu0 0
        %1140 = vmatpush1.bf16.msra.mxu0 %v1092
        %1141 = vmatprep.mubr.bf16.mxu0 %v966
        %1142 = vmatmul.mubr.bf16.gmra.mrb[0].mxu0 %v965
        %v1143 = vpop.f32.mrb[0].mxu0
        %v1144 = vadd.f32 0.0, %v1143
        %v1145 = vpop.f32.mrb[0].mxu0
        %v1146 = vpop.f32.mrb[0].mxu0
        %v1147 = vadd.f32 0.0, %v1146
        %v1148 = vpop.f32.mrb[0].mxu0
        %1149 = vmatprep.mubr.bf16.mxu0 %v968
        %1150 = vmatmul.mubr.bf16.gmra.mrb[0].mxu0 %v967
        %v1151 = vpop.f32.mrb[0].mxu0
        %v1152 = vadd.f32 0.0, %v1151
        %v1153 = vpop.f32.mrb[0].mxu0
        %v1154 = vpop.f32.mrb[0].mxu0
        %v1155 = vadd.f32 0.0, %v1154
        %v1156 = vpop.f32.mrb[0].mxu0
        %1157 = vmatprep.mubr.bf16.mxu0 %v970
        %1158 = vmatmul.mubr.bf16.gmra.mrb[0].mxu0 %v969
        %v1159 = vpop.f32.mrb[0].mxu0
        %v1160 = vadd.f32 0.0, %v1159
        %v1161 = vpop.f32.mrb[0].mxu0
        %v1162 = vpop.f32.mrb[0].mxu0
        %v1163 = vadd.f32 0.0, %v1162
        %v1164 = vpop.f32.mrb[0].mxu0
        %1165 = vmatprep.mubr.bf16.mxu0 %v972
        %1166 = vmatmul.mubr.bf16.gmra.mrb[0].mxu0 %v971
        %v1167 = vpop.f32.mrb[0].mxu0
        %v1168 = vadd.f32 0.0, %v1167
        %v1169 = vpop.f32.mrb[0].mxu0
        %v1170 = vpop.f32.mrb[0].mxu0
        %v1171 = vadd.f32 0.0, %v1170
        %v1172 = vpop.f32.mrb[0].mxu0
        %1173 = vmatprep.mubr.bf16.mxu0 %v974
        %1174 = vmatmul.mubr.bf16.gmra.mrb[0].mxu0 %v973
        %v1175 = vpop.f32.mrb[0].mxu0
        %v1176 = vadd.f32 0.0, %v1175
        %v1177 = vpop.f32.mrb[0].mxu0
        %v1178 = vpop.f32.mrb[0].mxu0
        %v1179 = vadd.f32 0.0, %v1178
        %v1180 = vpop.f32.mrb[0].mxu0
        %1181 = vmatprep.mubr.bf16.mxu0 %v976
        %1182 = vmatmul.mubr.bf16.gmra.mrb[0].mxu0 %v975
        %v1183 = vpop.f32.mrb[0].mxu0
        %v1184 = vadd.f32 0.0, %v1183
        %v1185 = vpop.f32.mrb[0].mxu0
        %v1186 = vpop.f32.mrb[0].mxu0
        %v1187 = vadd.f32 0.0, %v1186
        %v1188 = vpop.f32.mrb[0].mxu0
        %1189 = vmatprep.mubr.bf16.mxu0 %v978
        %1190 = vmatmul.mubr.bf16.gmra.mrb[0].mxu0 %v977
        %v1191 = vpop.f32.mrb[0].mxu0
        %v1192 = vadd.f32 0.0, %v1191
        %v1193 = vpop.f32.mrb[0].mxu0
        %v1194 = vpop.f32.mrb[0].mxu0
        %v1195 = vadd.f32 0.0, %v1194
        %v1196 = vpop.f32.mrb[0].mxu0
        %1197 = vmatprep.mubr.bf16.mxu0 %v980
        %1198 = vmatmul.mubr.bf16.gmra.mrb[0].mxu0 %v979
        %v1199 = vpop.f32.mrb[0].mxu0
        %v1200 = vadd.f32 0.0, %v1199
        %v1201 = vpop.f32.mrb[0].mxu0
        %v1202 = vpop.f32.mrb[0].mxu0
        %v1203 = vadd.f32 0.0, %v1202
        %v1204 = vpop.f32.mrb[0].mxu0
        %1205 = vdwg.mxu0
        %v1206 = vadd.f32 %v949, %v1144
        %v1207 = vadd.f32 %v950, %v1147
        %v1208 = vadd.f32 %v951, %v1152
        %v1209 = vadd.f32 %v952, %v1155
        %v1210 = vadd.f32 %v953, %v1160
        %v1211 = vadd.f32 %v954, %v1163
        %v1212 = vadd.f32 %v955, %v1168
        %v1213 = vadd.f32 %v956, %v1171
        %v1214 = vadd.f32 %v957, %v1176
        %v1215 = vadd.f32 %v958, %v1179
        %v1216 = vadd.f32 %v959, %v1184
        %v1217 = vadd.f32 %v960, %v1187
        %v1218 = vadd.f32 %v961, %v1192
        %v1219 = vadd.f32 %v962, %v1195
        %v1220 = vadd.f32 %v963, %v1200
        %v1221 = vadd.f32 %v964, %v1203
        %1222 = vst [vmem:[#allocation2] sm:$0xff] %v1206
        %1223 = vst [vmem:[#allocation2 + $0x8] sm:$0xff] %v1207
        %1224 = vst [vmem:[#allocation2 + $0x10] sm:$0xff] %v1208
        %1225 = vst [vmem:[#allocation2 + $0x18] sm:$0xff] %v1209
        %1226 = vst [vmem:[#allocation2 + $0x20] sm:$0xff] %v1210
        %1227 = vst [vmem:[#allocation2 + $0x28] sm:$0xff] %v1211
        %1228 = vst [vmem:[#allocation2 + $0x30] sm:$0xff] %v1212
        %1229 = vst [vmem:[#allocation2 + $0x38] sm:$0xff] %v1213
        %1230 = vst [vmem:[#allocation2 + $0x40] sm:$0xff] %v1214
        %1231 = vst [vmem:[#allocation2 + $0x48] sm:$0xff] %v1215
        %1232 = vst [vmem:[#allocation2 + $0x50] sm:$0xff] %v1216
        %1233 = vst [vmem:[#allocation2 + $0x58] sm:$0xff] %v1217
        %1234 = vst [vmem:[#allocation2 + $0x60] sm:$0xff] %v1218
        %1235 = vst [vmem:[#allocation2 + $0x68] sm:$0xff] %v1219
        %1236 = vst [vmem:[#allocation2 + $0x70] sm:$0xff] %v1220
        %1237 = vst [vmem:[#allocation2 + $0x78] sm:$0xff] %v1221
        %p1238 = scmp.eq.s32.totalorder %s30, 1
        // Predicated region
        $region57: #{tpu_custom_call.1} parent=39 // pred_check
          %p1239 = pneg %p1238
        $region58: #{tpu_custom_call.1} parent=39 // pred_check_branch
          %1241 = sbr.rel (%p1239) target = $region60
        $region59: #{tpu_custom_call.1} parent=39 // pred_region
          %v1242 = vld [vmem:[#allocation2] sm:$0xff]
          %v1243 = vld [vmem:[#allocation2 + $0x8] sm:$0xff]
          %v1244 = vld [vmem:[#allocation2 + $0x10] sm:$0xff]
          %v1245 = vld [vmem:[#allocation2 + $0x18] sm:$0xff]
          %v1246 = vld [vmem:[#allocation2 + $0x20] sm:$0xff]
          %v1247 = vld [vmem:[#allocation2 + $0x28] sm:$0xff]
          %v1248 = vld [vmem:[#allocation2 + $0x30] sm:$0xff]
          %v1249 = vld [vmem:[#allocation2 + $0x38] sm:$0xff]
          %v1250 = vld [vmem:[#allocation2 + $0x40] sm:$0xff]
          %v1251 = vld [vmem:[#allocation2 + $0x48] sm:$0xff]
          %v1252 = vld [vmem:[#allocation2 + $0x50] sm:$0xff]
          %v1253 = vld [vmem:[#allocation2 + $0x58] sm:$0xff]
          %v1254 = vld [vmem:[#allocation2 + $0x60] sm:$0xff]
          %v1255 = vld [vmem:[#allocation2 + $0x68] sm:$0xff]
          %v1256 = vld [vmem:[#allocation2 + $0x70] sm:$0xff]
          %v1257 = vld [vmem:[#allocation2 + $0x78] sm:$0xff]
          %v1258 = vld [vmem:[%s4] sm:$0x1]
          %v1260 = vlaneseq
          %v1261 = vshrl.u32 %v1260, 7
          %v1262 = vsub.s32 0, %v1261
          %v1263 = vrot.slane %v1258, %v1262
          %v1265 = vadd.f32 %v1242, %v1263
          %v1266 = vadd.f32 %v1243, %v1263
          %v1267 = vadd.f32 %v1244, %v1263
          %v1268 = vadd.f32 %v1245, %v1263
          %v1269 = vadd.f32 %v1246, %v1263
          %v1270 = vadd.f32 %v1247, %v1263
          %v1271 = vadd.f32 %v1248, %v1263
          %v1272 = vadd.f32 %v1249, %v1263
          %v1273 = vadd.f32 %v1250, %v1263
          %v1274 = vadd.f32 %v1251, %v1263
          %v1275 = vadd.f32 %v1252, %v1263
          %v1276 = vadd.f32 %v1253, %v1263
          %v1277 = vadd.f32 %v1254, %v1263
          %v1278 = vadd.f32 %v1255, %v1263
          %v1279 = vadd.f32 %v1256, %v1263
          %v1280 = vadd.f32 %v1257, %v1263
          %1281 = vst [vmem:[%s345] sm:$0xff] %v1265
          %1282 = vst [vmem:[%s345 + $0x8] sm:$0xff] %v1266
          %1283 = vst [vmem:[%s345 + $0x10] sm:$0xff] %v1267
          %1284 = vst [vmem:[%s345 + $0x18] sm:$0xff] %v1268
          %1285 = vst [vmem:[%s345 + $0x20] sm:$0xff] %v1269
          %1286 = vst [vmem:[%s345 + $0x28] sm:$0xff] %v1270
          %1287 = vst [vmem:[%s345 + $0x30] sm:$0xff] %v1271
          %1288 = vst [vmem:[%s345 + $0x38] sm:$0xff] %v1272
          %1289 = vst [vmem:[%s345 + $0x40] sm:$0xff] %v1273
          %1290 = vst [vmem:[%s345 + $0x48] sm:$0xff] %v1274
          %1291 = vst [vmem:[%s345 + $0x50] sm:$0xff] %v1275
          %1292 = vst [vmem:[%s345 + $0x58] sm:$0xff] %v1276
          %1293 = vst [vmem:[%s345 + $0x60] sm:$0xff] %v1277
          %1294 = vst [vmem:[%s345 + $0x68] sm:$0xff] %v1278
          %1295 = vst [vmem:[%s345 + $0x70] sm:$0xff] %v1279
          %1296 = vst [vmem:[%s345 + $0x78] sm:$0xff] %v1280
        $region60: #{tpu_custom_call.1} parent=39 // pred_fallthru
          _
        %s1297 = sand.u32 %s170, 1
        %s1298 = scalar_lea.sflag [#allocation5], %s1297
        %s1299 = sand.u32 %s170, 1
        %s1300 = smul.addr %s1299, 128
        %s1301 = scalar_lea.vmem [#allocation9], %s1300
        // Predicated region
        $region61: #{tpu_custom_call.1} parent=39 // pred_check
          %p1302 = pneg %p180
        $region62: #{tpu_custom_call.1} parent=39 // pred_check_branch
          %1304 = sbr.rel (%p1302) target = $region64
        $region63: #{tpu_custom_call.1} parent=39 // pred_region
          %s1305 = smul.u32 16, %s29
          %s1307 = ssub.s32 2048, 2048
          %1308 = vsyncadd %s1298, %s1307
          %s1309 = smul.addr %s1305, 128
          %s1310 = scalar_lea.hbm %s5, %s1309
          %s1311 = sshll.u32 %s1301, 4
          %s1312 = int_to_ptr.vmem [resolvable:$true] %s1311
          %1317 = dma.vmem_to_hbm [thread:$0]  %s1312, 2048, %s1310, %s1298, 128, 128, 8
        $region64: #{tpu_custom_call.1} parent=39 // pred_fallthru
          _
      $region40: #{tpu_custom_call.1} parent=5 // pred_fallthru
        _
      %p1318 = scmp.le.s32.totalorder 2, %s20
      // Predicated region
      $region65: #{tpu_custom_call.1} parent=5 // pred_check
        %p1319 = pneg %p1318
      $region66: #{tpu_custom_call.1} parent=5 // pred_check_branch
        %1321 = sbr.rel (%p1319) target = $region68
      $region67: #{tpu_custom_call.1} parent=5 // pred_region
        %s1322 = ssub.s32 %s20, 2
        // Predicated region
        $region69: #{tpu_custom_call.1} parent=67 // pred_check
          %p1323 = pneg %p186
        $region70: #{tpu_custom_call.1} parent=67 // pred_check_branch
          %1325 = sbr.rel (%p1323) target = $region72
        $region71: #{tpu_custom_call.1} parent=67 // pred_region
          %s1326 = sand.u32 %s171, 1
          %s1327 = scalar_lea.sflag [#allocation5], %s1326
          %s1328 = sand.u32 %s171, 1
          %s1329 = smul.addr %s1328, 128
          %s1330 = scalar_lea.vmem [#allocation9], %s1329
          %1331 = dma.done %s1327, 2048
        $region72: #{tpu_custom_call.1} parent=67 // pred_fallthru
          _
      $region68: #{tpu_custom_call.1} parent=5 // pred_fallthru
        _
    $region6: #{tpu_custom_call.1} parent=1 // loop_footer
      %s24 = sadd.s32 1, %s20
    $region7: #{tpu_custom_call.1} parent=1 // loop_footer_branch
      %19 = sbr.rel target = $region3
    $region8: #{tpu_custom_call.1} parent=1 // loop_exit
      _
    %1332 = vsyncpa [#allocation4], 1
    %s1333 = scalar_lea.sflag [#allocation4], 1
    %1334 = vsyncpa %s1333, 1
    %1335 = vsyncpa [#allocation7], 1
    %s1336 = scalar_lea.sflag [#allocation7], 1
    %1337 = vsyncpa %s1336, 1
    %1338 = vsyncpa [#allocation5], 1
    %s1339 = scalar_lea.sflag [#allocation5], 1
    %1340 = vsyncpa %s1339, 1

</llo_original>
